<compile_context>
chip_gen: v7x
topology: tpu7x:2x2x1
jax: 0.10.0
libtpu: 0.0.40
codegen_flags: <defaults>
</compile_context>

<pallas_src>
import jax
import jax.numpy as jnp
from jax.experimental import pallas as pl
from jax.experimental.pallas import tpu as pltpu


def classifier_kernel(x_ref, w_ref, b_ref, o_ref):
    # In-register cast of the streamed tile to bf16 for the MXU (x is kept at
    # the caller's dtype in HBM/VMEM so no extra HBM pass is spent on casting).
    x = x_ref[...].astype(jnp.bfloat16)

    # Linear: (TM, 640)bf16 @ (640, 10)bf16 -> (TM, 10) f32 accumulation on MXU
    z = jnp.dot(x, w_ref[...], preferred_element_type=jnp.float32)
    z = z + b_ref[...]  # broadcast (1, 10) f32 bias over the batch tile

    # Softmax along dim=1 (numerically stable, all in f32)
    z = z - jnp.max(z, axis=1, keepdims=True)
    e = jnp.exp(z)
    denom = jnp.sum(e, axis=1, keepdims=True)
    # approx reciprocal runs on the otherwise-idle EUP slot
    o_ref[...] = (e * pl.reciprocal(denom, approx=True)).astype(o_ref.dtype)


def _round_up(n, m):
    return ((n + m - 1) // m) * m


def classifier_forward(x, w, b, *, tm=1024):
    """x: (B, 640) f32/bf16, w: (640, 10), b: (10,) -> softmax(x @ w + b), f32."""
    B, D_in = x.shape
    D_out = w.shape[1]

    # Weight/bias are tiny (<26 KiB); casting them wrapper-side is negligible
    # and keeps one resident bf16 copy in VMEM for the whole grid.
    w_bf = w.astype(jnp.bfloat16)
    b2d = b.reshape(1, D_out).astype(jnp.float32)

    # Batch tile: big enough that the ~0.35 us per-grid-step overhead is
    # amortized, small enough that the double-buffered f32 x tile (~5 MiB at
    # TM=1024) fits the scoped VMEM limit on all generations. x stays f32 in
    # VMEM (cast happens in-register), so 8-sublane alignment is sufficient.
    TM = min(tm, _round_up(B, 8))
    grid = (pl.cdiv(B, TM),)  # last block may be partial; no jnp.pad of x

    x_bytes = B * D_in * x.dtype.itemsize
    cost = pl.CostEstimate(
        flops=2 * B * D_in * D_out,
        transcendentals=B * D_out,  # exp per output element (+ cheap recip)
        bytes_accessed=x_bytes + D_in * D_out * 2 + D_out * 4 + B * D_out * 4,
    )

    out = pl.pallas_call(
        classifier_kernel,
        out_shape=jax.ShapeDtypeStruct((B, D_out), jnp.float32),
        grid_spec=pltpu.PrefetchScalarGridSpec(
            num_scalar_prefetch=0,
            grid=grid,
            in_specs=[
                pl.BlockSpec((TM, D_in), lambda i: (i, 0)),     # streamed x tile
                pl.BlockSpec((D_in, D_out), lambda i: (0, 0)),  # resident weight
                pl.BlockSpec((1, D_out), lambda i: (0, 0)),     # resident bias
            ],
            out_specs=pl.BlockSpec((TM, D_out), lambda i: (i, 0)),
        ),
        compiler_params=pltpu.CompilerParams(
            # every batch tile is independent -> shard across TCs on v7x
            dimension_semantics=("parallel",),
            # explicit limit: v5e's default scoped VMEM is only 16 MiB
            vmem_limit_bytes=32 * 1024 * 1024,
        ),
        cost_estimate=cost,
    )(x, w_bf, b2d)

    return out


if __name__ == "__main__":
    key = jax.random.PRNGKey(0)
    k_x, k_w, k_b = jax.random.split(key, 3)

    B, D_in, D_out = 8, 640, 10

    # Deterministic synthetic parameters (PyTorch Linear default: U(-1/sqrt(in), 1/sqrt(in)))
    bound = 1.0 / jnp.sqrt(jnp.float32(D_in))
    w = jax.random.uniform(k_w, (D_in, D_out), jnp.float32, -bound, bound)
    b = jax.random.uniform(k_b, (D_out,), jnp.float32, -bound, bound)

    x = jax.random.normal(k_x, (B, D_in), jnp.float32)

    out = classifier_forward(x, w, b)
    out = jax.block_until_ready(out)
    assert out.shape == (B, D_out)

    # Reference using the same bf16-input / f32-accumulate path as the kernel
    ref_bf16 = jax.nn.softmax(
        jnp.dot(x.astype(jnp.bfloat16), w.astype(jnp.bfloat16),
                preferred_element_type=jnp.float32) + b,
        axis=1,
    )
    assert jnp.allclose(out, ref_bf16, atol=5e-3, rtol=5e-3)

    # Sanity vs. full-precision reference (looser: bf16 MXU inputs + approx recip)
    ref_f32 = jax.nn.softmax(x @ w + b, axis=1)
    assert jnp.allclose(out, ref_f32, atol=5e-2, rtol=5e-2)

    # Rows sum to ~1 (approx reciprocal => relaxed tolerance)
    assert jnp.allclose(jnp.sum(out, axis=1), jnp.ones((B,)), atol=5e-3)

    print("KERNEL_OK")
</pallas_src>

<mosaic_0001>
module attributes {stable_mosaic.version = 11 : i64} {
  func.func @classifier_kernel(%arg0: i32, %arg1: memref<8x640xf32, #tpu.memory_space<vmem>>, %arg2: memref<640x10xbf16, #tpu.memory_space<vmem>>, %arg3: memref<1x10xf32, #tpu.memory_space<vmem>>, %arg4: memref<8x10xf32, #tpu.memory_space<vmem>>) attributes {dimension_semantics = [#tpu.dimension_semantics<parallel>], iteration_bounds = array<i64: 1>, scalar_prefetch = 0 : i64, scratch_operands = 0 : i64, tpu.core_type = #tpu.core_type<tc>, window_params = [{transform_indices = @transform_0, window_bounds = array<i64: 8, 640>}, {pipeline_mode = #tpu.pipeline_mode<synchronous>, transform_indices = @transform_1, window_bounds = array<i64: 640, 10>}, {pipeline_mode = #tpu.pipeline_mode<synchronous>, transform_indices = @transform_2, window_bounds = array<i64: 1, 10>}, {transform_indices = @transform_3, window_bounds = array<i64: 8, 10>}]} {
    %c0 = arith.constant 0 : index
    %c0_0 = arith.constant 0 : index
    %0 = vector.load %arg1[%c0, %c0_0] : memref<8x640xf32, #tpu.memory_space<vmem>>, vector<8x640xf32>
    %1 = arith.truncf %0 : vector<8x640xf32> to vector<8x640xbf16>
    %c0_1 = arith.constant 0 : index
    %c0_2 = arith.constant 0 : index
    %2 = vector.load %arg2[%c0_1, %c0_2] : memref<640x10xbf16, #tpu.memory_space<vmem>>, vector<640x10xbf16>
    %cst = arith.constant dense<0.000000e+00> : vector<8x10xf32>
    %3 = tpu.matmul %1, %2, %cst {dimension_numbers = #tpu.dot_dimension_numbers<[1], [0], [0], [1], [0, 0, 1, 1], [], []>} : vector<8x640xbf16>, vector<640x10xbf16>, vector<8x10xf32> -> vector<8x10xf32>
    %c0_3 = arith.constant 0 : index
    %c0_4 = arith.constant 0 : index
    %4 = vector.load %arg3[%c0_3, %c0_4] : memref<1x10xf32, #tpu.memory_space<vmem>>, vector<1x10xf32>
    %5 = vector.broadcast %4 : vector<1x10xf32> to vector<8x10xf32>
    %6 = arith.addf %3, %5 : vector<8x10xf32>
    %cst_5 = arith.constant dense<0xFF800000> : vector<8xf32>
    %7 = vector.multi_reduction <maximumf>, %6, %cst_5 [1] : vector<8x10xf32> to vector<8xf32>
    %8 = vector.shape_cast %7 : vector<8xf32> to vector<8x1xf32>
    %9 = vector.broadcast %8 : vector<8x1xf32> to vector<8x10xf32>
    %10 = arith.subf %6, %9 : vector<8x10xf32>
    %11 = math.exp %10 : vector<8x10xf32>
    %cst_6 = arith.constant dense<0.000000e+00> : vector<8xf32>
    %12 = vector.multi_reduction <add>, %11, %cst_6 [1] : vector<8x10xf32> to vector<8xf32>
    %13 = vector.shape_cast %12 : vector<8xf32> to vector<8x1xf32>
    %14 = tpu.reciprocal %13 {approx = true} : vector<8x1xf32> -> vector<8x1xf32>
    %15 = vector.broadcast %14 : vector<8x1xf32> to vector<8x10xf32>
    %16 = arith.mulf %11, %15 : vector<8x10xf32>
    %c0_7 = arith.constant 0 : index
    %c0_8 = arith.constant 0 : index
    %17 = vector.load %arg4[%c0_7, %c0_8] : memref<8x10xf32, #tpu.memory_space<vmem>>, vector<8x10xf32>
    tpu.vector_store %arg4[%c0_7, %c0_8], %16 {strides = array<i32>} : memref<8x10xf32, #tpu.memory_space<vmem>>, vector<8x10xf32>,
    return
  }
  func.func @transform_0(%arg0: i32) -> (i32, i32) {
    %c0_i32 = arith.constant 0 : i32
    %c0_i32_0 = arith.constant 0 : i32
    return %arg0, %c0_i32 : i32, i32
  }
  func.func @transform_1(%arg0: i32) -> (i32, i32) {
    %c0_i32 = arith.constant 0 : i32
    %c0_i32_0 = arith.constant 0 : i32
    %c0_i32_1 = arith.constant 0 : i32
    return %c0_i32, %c0_i32_0 : i32, i32
  }
  func.func @transform_2(%arg0: i32) -> (i32, i32) {
    %c0_i32 = arith.constant 0 : i32
    %c0_i32_0 = arith.constant 0 : i32
    %c0_i32_1 = arith.constant 0 : i32
    return %c0_i32, %c0_i32_0 : i32, i32
  }
  func.func @transform_3(%arg0: i32) -> (i32, i32) {
    %c0_i32 = arith.constant 0 : i32
    %c0_i32_0 = arith.constant 0 : i32
    return %arg0, %c0_i32 : i32, i32
  }
}

</mosaic_0001>

<llo_original>
// kernel: tpu_custom_call.1
$region0: #{tpu_custom_call.1}
  #allocation0 [shape = 'u32[]', space=smem, size = 0x4, offset = 0x4, fixed_abs, tag = 'smem constant byte address 0x4 - core index']
  #allocation1 [shape = 'u32[144,128]{1,0:T(1,128)}', space=vmem, size = 0x12000, scoped, tag = 'internal scratch']
  %s0 = inlined_call_operand.vmem [shape: f32[8,640], index: 0, kind: input, shape index: {}]
  %s1 = inlined_call_operand.vmem [shape: bf16[640,10], index: 1, kind: input, shape index: {}]
  %s2 = inlined_call_operand.vmem [shape: f32[1,10], index: 2, kind: input, shape index: {}]
  %s3 = inlined_call_operand.hbm [shape: f32[8,10], index: 3, kind: output, shape index: {}]
  %s4 = sld [smem:[#allocation0]]
  $region22: #{tpu_custom_call.1} parent=0
    _
  %s6 = ssub.s32 1, %s4
  %s7 = scalar_select 0, %s6, %s4
  $region1: #{tpu_custom_call.1} parent=0
    #allocation2 [shape = 'u8[4096]{0}', space=vmem, size = 0x1000, scoped, tag = 'output window, operand 0, single buffered']
    #allocation3 [shape = 's32[1]{0}', space=sflag, size = 0x4, scoped, tag = 'scoped memory for tpu_custom_call.1']
    %8 = vsyncpa [#allocation3], 0
    // Predicated region
    $region2: #{tpu_custom_call.1} parent=1 // pred_check
      _
    $region3: #{tpu_custom_call.1} parent=1 // pred_check_branch
      %10 = sbr.rel (0) target = $region5
    $region4: #{tpu_custom_call.1} parent=1 // pred_region
      _
    $region5: #{tpu_custom_call.1} parent=1 // pred_fallthru
      _
    // Predicated region
    $region6: #{tpu_custom_call.1} parent=1 // pred_check
      _
    $region7: #{tpu_custom_call.1} parent=1 // pred_check_branch
      %12 = sbr.rel (0) target = $region9
    $region8: #{tpu_custom_call.1} parent=1 // pred_region
      _
    $region9: #{tpu_custom_call.1} parent=1 // pred_fallthru
      _
    // Predicated region
    $region10: #{tpu_custom_call.1} parent=1 // pred_check
      _
    $region11: #{tpu_custom_call.1} parent=1 // pred_check_branch
      %14 = sbr.rel (0) target = $region13
    $region12: #{tpu_custom_call.1} parent=1 // pred_region
      _
    $region13: #{tpu_custom_call.1} parent=1 // pred_fallthru
      _
    %v16 = vld [vmem:[%s0] sm:$0xff]
    %v17 = vld [vmem:[%s0 + $0x8] sm:$0xff]
    %v18 = vld [vmem:[%s0 + $0x10] sm:$0xff]
    %v19 = vld [vmem:[%s0 + $0x18] sm:$0xff]
    %v20 = vld [vmem:[%s0 + $0x20] sm:$0xff]
    %v21 = vpack.c.bf16 %v16, %v16
    %v22 = vpack.c.bf16 %v17, %v17
    %v23 = vpack.c.bf16 %v18, %v18
    %v24 = vpack.c.bf16 %v19, %v19
    %v25 = vpack.c.bf16 %v20, %v20
    %v26 = vld [vmem:[%s1] sm:$0xf]
    %v27 = vld [vmem:[%s1 + $0x4] sm:$0xf]
    %v28 = vld [vmem:[%s1 + $0x8] sm:$0xf]
    %v29 = vld [vmem:[%s1 + $0xc] sm:$0xf]
    %v30 = vld [vmem:[%s1 + $0x10] sm:$0xf]
    %v31 = vld [vmem:[%s1 + $0x14] sm:$0xf]
    %v32 = vld [vmem:[%s1 + $0x18] sm:$0xf]
    %v33 = vld [vmem:[%s1 + $0x1c] sm:$0xf]
    %v34 = vld [vmem:[%s1 + $0x20] sm:$0xf]
    %v35 = vld [vmem:[%s1 + $0x24] sm:$0xf]
    %v36 = vld [vmem:[%s1 + $0x28] sm:$0xf]
    %v37 = vld [vmem:[%s1 + $0x2c] sm:$0xf]
    %v38 = vld [vmem:[%s1 + $0x30] sm:$0xf]
    %v39 = vld [vmem:[%s1 + $0x34] sm:$0xf]
    %v40 = vld [vmem:[%s1 + $0x38] sm:$0xf]
    %v41 = vld [vmem:[%s1 + $0x3c] sm:$0xf]
    %v42 = vld [vmem:[%s1 + $0x40] sm:$0xf]
    %v43 = vld [vmem:[%s1 + $0x44] sm:$0xf]
    %v44 = vld [vmem:[%s1 + $0x48] sm:$0xf]
    %v45 = vld [vmem:[%s1 + $0x4c] sm:$0xf]
    %v46 = vld [vmem:[%s1 + $0x50] sm:$0xf]
    %v47 = vld [vmem:[%s1 + $0x54] sm:$0xf]
    %v48 = vld [vmem:[%s1 + $0x58] sm:$0xf]
    %v49 = vld [vmem:[%s1 + $0x5c] sm:$0xf]
    %v50 = vld [vmem:[%s1 + $0x60] sm:$0xf]
    %v51 = vld [vmem:[%s1 + $0x64] sm:$0xf]
    %v52 = vld [vmem:[%s1 + $0x68] sm:$0xf]
    %v53 = vld [vmem:[%s1 + $0x6c] sm:$0xf]
    %v54 = vld [vmem:[%s1 + $0x70] sm:$0xf]
    %v55 = vld [vmem:[%s1 + $0x74] sm:$0xf]
    %v56 = vld [vmem:[%s1 + $0x78] sm:$0xf]
    %v57 = vld [vmem:[%s1 + $0x7c] sm:$0xf]
    %v58 = vld [vmem:[%s1 + $0x80] sm:$0xf]
    %v59 = vld [vmem:[%s1 + $0x84] sm:$0xf]
    %v60 = vld [vmem:[%s1 + $0x88] sm:$0xf]
    %v61 = vld [vmem:[%s1 + $0x8c] sm:$0xf]
    %v62 = vld [vmem:[%s1 + $0x90] sm:$0xf]
    %v63 = vld [vmem:[%s1 + $0x94] sm:$0xf]
    %v64 = vld [vmem:[%s1 + $0x98] sm:$0xf]
    %v65 = vld [vmem:[%s1 + $0x9c] sm:$0xf]
    %v66 = vld [vmem:[%s1 + $0xa0] sm:$0xf]
    %v67 = vld [vmem:[%s1 + $0xa4] sm:$0xf]
    %v68 = vld [vmem:[%s1 + $0xa8] sm:$0xf]
    %v69 = vld [vmem:[%s1 + $0xac] sm:$0xf]
    %v70 = vld [vmem:[%s1 + $0xb0] sm:$0xf]
    %v71 = vld [vmem:[%s1 + $0xb4] sm:$0xf]
    %v72 = vld [vmem:[%s1 + $0xb8] sm:$0xf]
    %v73 = vld [vmem:[%s1 + $0xbc] sm:$0xf]
    %v74 = vld [vmem:[%s1 + $0xc0] sm:$0xf]
    %v75 = vld [vmem:[%s1 + $0xc4] sm:$0xf]
    %v76 = vld [vmem:[%s1 + $0xc8] sm:$0xf]
    %v77 = vld [vmem:[%s1 + $0xcc] sm:$0xf]
    %v78 = vld [vmem:[%s1 + $0xd0] sm:$0xf]
    %v79 = vld [vmem:[%s1 + $0xd4] sm:$0xf]
    %v80 = vld [vmem:[%s1 + $0xd8] sm:$0xf]
    %v81 = vld [vmem:[%s1 + $0xdc] sm:$0xf]
    %v82 = vld [vmem:[%s1 + $0xe0] sm:$0xf]
    %v83 = vld [vmem:[%s1 + $0xe4] sm:$0xf]
    %v84 = vld [vmem:[%s1 + $0xe8] sm:$0xf]
    %v85 = vld [vmem:[%s1 + $0xec] sm:$0xf]
    %v86 = vld [vmem:[%s1 + $0xf0] sm:$0xf]
    %v87 = vld [vmem:[%s1 + $0xf4] sm:$0xf]
    %v88 = vld [vmem:[%s1 + $0xf8] sm:$0xf]
    %v89 = vld [vmem:[%s1 + $0xfc] sm:$0xf]
    %v90 = vld [vmem:[%s1 + $0x100] sm:$0xf]
    %v91 = vld [vmem:[%s1 + $0x104] sm:$0xf]
    %v92 = vld [vmem:[%s1 + $0x108] sm:$0xf]
    %v93 = vld [vmem:[%s1 + $0x10c] sm:$0xf]
    %v94 = vld [vmem:[%s1 + $0x110] sm:$0xf]
    %v95 = vld [vmem:[%s1 + $0x114] sm:$0xf]
    %v96 = vld [vmem:[%s1 + $0x118] sm:$0xf]
    %v97 = vld [vmem:[%s1 + $0x11c] sm:$0xf]
    %v98 = vld [vmem:[%s1 + $0x120] sm:$0xf]
    %v99 = vld [vmem:[%s1 + $0x124] sm:$0xf]
    %v100 = vld [vmem:[%s1 + $0x128] sm:$0xf]
    %v101 = vld [vmem:[%s1 + $0x12c] sm:$0xf]
    %v102 = vld [vmem:[%s1 + $0x130] sm:$0xf]
    %v103 = vld [vmem:[%s1 + $0x134] sm:$0xf]
    %v104 = vld [vmem:[%s1 + $0x138] sm:$0xf]
    %v105 = vld [vmem:[%s1 + $0x13c] sm:$0xf]
    %v106 = vld [vmem:[%s2] sm:$0x1]
    %v108 = vlaneseq
    %v109 = vshrl.u32 %v108, 7
    %v110 = vsub.s32 0, %v109
    %v111 = vrot.slane %v106, %v110
    %v193 = vunpack.c.l.b16 %v26
    %v194 = vunpack.c.l.b16 %v27
    %v195 = vunpack.c.l.b16 %v28
    %v196 = vunpack.c.l.b16 %v29
    %v197 = vunpack.c.l.b16 %v30
    %v198 = vunpack.c.l.b16 %v31
    %v199 = vunpack.c.l.b16 %v32
    %v200 = vunpack.c.l.b16 %v33
    %v201 = vunpack.c.l.b16 %v34
    %v202 = vunpack.c.l.b16 %v35
    %v203 = vunpack.c.l.b16 %v36
    %v204 = vunpack.c.l.b16 %v37
    %v205 = vunpack.c.l.b16 %v38
    %v206 = vunpack.c.l.b16 %v39
    %v207 = vunpack.c.l.b16 %v40
    %v208 = vunpack.c.l.b16 %v41
    %v209 = vunpack.c.l.b16 %v42
    %v210 = vunpack.c.l.b16 %v43
    %v211 = vunpack.c.l.b16 %v44
    %v212 = vunpack.c.l.b16 %v45
    %v213 = vunpack.c.l.b16 %v46
    %v214 = vunpack.c.l.b16 %v47
    %v215 = vunpack.c.l.b16 %v48
    %v216 = vunpack.c.l.b16 %v49
    %v217 = vunpack.c.l.b16 %v50
    %v218 = vunpack.c.l.b16 %v51
    %v219 = vunpack.c.l.b16 %v52
    %v220 = vunpack.c.l.b16 %v53
    %v221 = vunpack.c.l.b16 %v54
    %v222 = vunpack.c.l.b16 %v55
    %v223 = vunpack.c.l.b16 %v56
    %v224 = vunpack.c.l.b16 %v57
    %v225 = vunpack.c.l.b16 %v58
    %v226 = vunpack.c.l.b16 %v59
    %v227 = vunpack.c.l.b16 %v60
    %v228 = vunpack.c.l.b16 %v61
    %v229 = vunpack.c.l.b16 %v62
    %v230 = vunpack.c.l.b16 %v63
    %v231 = vunpack.c.l.b16 %v64
    %v232 = vunpack.c.l.b16 %v65
    %v233 = vunpack.c.l.b16 %v66
    %v234 = vunpack.c.l.b16 %v67
    %v235 = vunpack.c.l.b16 %v68
    %v236 = vunpack.c.l.b16 %v69
    %v237 = vunpack.c.l.b16 %v70
    %v238 = vunpack.c.l.b16 %v71
    %v239 = vunpack.c.l.b16 %v72
    %v240 = vunpack.c.l.b16 %v73
    %v241 = vunpack.c.l.b16 %v74
    %v242 = vunpack.c.l.b16 %v75
    %v243 = vunpack.c.l.b16 %v76
    %v244 = vunpack.c.l.b16 %v77
    %v245 = vunpack.c.l.b16 %v78
    %v246 = vunpack.c.l.b16 %v79
    %v247 = vunpack.c.l.b16 %v80
    %v248 = vunpack.c.l.b16 %v81
    %v249 = vunpack.c.l.b16 %v82
    %v250 = vunpack.c.l.b16 %v83
    %v251 = vunpack.c.l.b16 %v84
    %v252 = vunpack.c.l.b16 %v85
    %v253 = vunpack.c.l.b16 %v86
    %v254 = vunpack.c.l.b16 %v87
    %v255 = vunpack.c.l.b16 %v88
    %v256 = vunpack.c.l.b16 %v89
    %v257 = vunpack.c.l.b16 %v90
    %v258 = vunpack.c.l.b16 %v91
    %v259 = vunpack.c.l.b16 %v92
    %v260 = vunpack.c.l.b16 %v93
    %v261 = vunpack.c.l.b16 %v94
    %v262 = vunpack.c.l.b16 %v95
    %v263 = vunpack.c.l.b16 %v96
    %v264 = vunpack.c.l.b16 %v97
    %v265 = vunpack.c.l.b16 %v98
    %v266 = vunpack.c.l.b16 %v99
    %v267 = vunpack.c.l.b16 %v100
    %v268 = vunpack.c.l.b16 %v101
    %v269 = vunpack.c.l.b16 %v102
    %v270 = vunpack.c.l.b16 %v103
    %v271 = vunpack.c.l.b16 %v104
    %v272 = vunpack.c.l.b16 %v105
    %v273 = vpack.c.b16 %v194, %v193
    %v274 = vpack.c.b16 %v196, %v195
    %v275 = vpack.c.b16 %v198, %v197
    %v276 = vpack.c.b16 %v200, %v199
    %v277 = vpack.c.b16 %v202, %v201
    %v278 = vpack.c.b16 %v204, %v203
    %v279 = vpack.c.b16 %v206, %v205
    %v280 = vpack.c.b16 %v208, %v207
    %v281 = vpack.c.b16 %v210, %v209
    %v282 = vpack.c.b16 %v212, %v211
    %v283 = vpack.c.b16 %v214, %v213
    %v284 = vpack.c.b16 %v216, %v215
    %v285 = vpack.c.b16 %v218, %v217
    %v286 = vpack.c.b16 %v220, %v219
    %v287 = vpack.c.b16 %v222, %v221
    %v288 = vpack.c.b16 %v224, %v223
    %v289 = vpack.c.b16 %v226, %v225
    %v290 = vpack.c.b16 %v228, %v227
    %v291 = vpack.c.b16 %v230, %v229
    %v292 = vpack.c.b16 %v232, %v231
    %v293 = vpack.c.b16 %v234, %v233
    %v294 = vpack.c.b16 %v236, %v235
    %v295 = vpack.c.b16 %v238, %v237
    %v296 = vpack.c.b16 %v240, %v239
    %v297 = vpack.c.b16 %v242, %v241
    %v298 = vpack.c.b16 %v244, %v243
    %v299 = vpack.c.b16 %v246, %v245
    %v300 = vpack.c.b16 %v248, %v247
    %v301 = vpack.c.b16 %v250, %v249
    %v302 = vpack.c.b16 %v252, %v251
    %v303 = vpack.c.b16 %v254, %v253
    %v304 = vpack.c.b16 %v256, %v255
    %v305 = vpack.c.b16 %v258, %v257
    %v306 = vpack.c.b16 %v260, %v259
    %v307 = vpack.c.b16 %v262, %v261
    %v308 = vpack.c.b16 %v264, %v263
    %v309 = vpack.c.b16 %v266, %v265
    %v310 = vpack.c.b16 %v268, %v267
    %v311 = vpack.c.b16 %v270, %v269
    %v312 = vpack.c.b16 %v272, %v271
    %353 = vmatprep.subr.bf16.mxu0 0
    %354 = vmatpush1.bf16.msra.mxu0 %v273
    %355 = vmatprep.subr.bf16.mxu0 0
    %356 = vmatpush1.bf16.msra.mxu0 %v274
    %357 = vmatprep.subr.bf16.mxu0 0
    %358 = vmatpush1.bf16.msra.mxu0 %v275
    %359 = vmatprep.subr.bf16.mxu0 0
    %360 = vmatpush1.bf16.msra.mxu0 %v276
    %361 = vmatprep.subr.bf16.mxu0 0
    %362 = vmatpush1.bf16.msra.mxu0 %v277
    %363 = vmatprep.subr.bf16.mxu0 0
    %364 = vmatpush1.bf16.msra.mxu0 %v278
    %365 = vmatprep.subr.bf16.mxu0 0
    %366 = vmatpush1.bf16.msra.mxu0 %v279
    %367 = vmatprep.subr.bf16.mxu0 0
    %368 = vmatpush1.bf16.msra.mxu0 %v280
    %369 = vmatprep.subr.bf16.mxu0 0
    %370 = vmatpush1.bf16.msra.mxu0 %v281
    %371 = vmatprep.subr.bf16.mxu0 0
    %372 = vmatpush1.bf16.msra.mxu0 %v282
    %373 = vmatprep.subr.bf16.mxu0 0
    %374 = vmatpush1.bf16.msra.mxu0 %v283
    %375 = vmatprep.subr.bf16.mxu0 0
    %376 = vmatpush1.bf16.msra.mxu0 %v284
    %377 = vmatprep.subr.bf16.mxu0 0
    %378 = vmatpush1.bf16.msra.mxu0 %v285
    %379 = vmatprep.subr.bf16.mxu0 0
    %380 = vmatpush1.bf16.msra.mxu0 %v286
    %381 = vmatprep.subr.bf16.mxu0 0
    %382 = vmatpush1.bf16.msra.mxu0 %v287
    %383 = vmatprep.subr.bf16.mxu0 0
    %384 = vmatpush1.bf16.msra.mxu0 %v288
    %385 = vmatprep.mubr.bf16.mxu0 %v22
    %386 = vmatmul.mubr.bf16.gmra.mrb[0].mxu0 %v21
    %v387 = vpop.f32.mrb[0].mxu0
    %v388 = vadd.f32 %v111, %v387
    %v389 = vpop.f32.mrb[0].mxu0
    %v390 = vpop.f32.mrb[0].mxu0
    %v391 = vpop.f32.mrb[0].mxu0
    %392 = vdwg.mxu0
    %393 = vmatprep.subr.bf16.mxu0 0
    %394 = vmatpush1.bf16.msra.mxu0 %v289
    %395 = vmatprep.subr.bf16.mxu0 0
    %396 = vmatpush1.bf16.msra.mxu0 %v290
    %397 = vmatprep.subr.bf16.mxu0 0
    %398 = vmatpush1.bf16.msra.mxu0 %v291
    %399 = vmatprep.subr.bf16.mxu0 0
    %400 = vmatpush1.bf16.msra.mxu0 %v292
    %401 = vmatprep.subr.bf16.mxu0 0
    %402 = vmatpush1.bf16.msra.mxu0 %v293
    %403 = vmatprep.subr.bf16.mxu0 0
    %404 = vmatpush1.bf16.msra.mxu0 %v294
    %405 = vmatprep.subr.bf16.mxu0 0
    %406 = vmatpush1.bf16.msra.mxu0 %v295
    %407 = vmatprep.subr.bf16.mxu0 0
    %408 = vmatpush1.bf16.msra.mxu0 %v296
    %409 = vmatprep.subr.bf16.mxu0 0
    %410 = vmatpush1.bf16.msra.mxu0 %v297
    %411 = vmatprep.subr.bf16.mxu0 0
    %412 = vmatpush1.bf16.msra.mxu0 %v298
    %413 = vmatprep.subr.bf16.mxu0 0
    %414 = vmatpush1.bf16.msra.mxu0 %v299
    %415 = vmatprep.subr.bf16.mxu0 0
    %416 = vmatpush1.bf16.msra.mxu0 %v300
    %417 = vmatprep.subr.bf16.mxu0 0
    %418 = vmatpush1.bf16.msra.mxu0 %v301
    %419 = vmatprep.subr.bf16.mxu0 0
    %420 = vmatpush1.bf16.msra.mxu0 %v302
    %421 = vmatprep.subr.bf16.mxu0 0
    %422 = vmatpush1.bf16.msra.mxu0 %v303
    %423 = vmatprep.subr.bf16.mxu0 0
    %424 = vmatpush1.bf16.msra.mxu0 %v304
    %425 = vmatprep.mubr.bf16.mxu0 %v24
    %426 = vmatmul.mubr.bf16.gmra.mrb[0].mxu0 %v23
    %v427 = vpop.f32.mrb[0].mxu0
    %v428 = vadd.f32 %v388, %v427
    %v429 = vpop.f32.mrb[0].mxu0
    %v430 = vpop.f32.mrb[0].mxu0
    %v431 = vpop.f32.mrb[0].mxu0
    %432 = vdwg.mxu0
    %433 = vmatprep.subr.bf16.mxu0 0
    %434 = vmatpush1.bf16.msra.mxu0 %v305
    %435 = vmatprep.subr.bf16.mxu0 0
    %436 = vmatpush1.bf16.msra.mxu0 %v306
    %437 = vmatprep.subr.bf16.mxu0 0
    %438 = vmatpush1.bf16.msra.mxu0 %v307
    %439 = vmatprep.subr.bf16.mxu0 0
    %440 = vmatpush1.bf16.msra.mxu0 %v308
    %441 = vmatprep.subr.bf16.mxu0 0
    %442 = vmatpush1.bf16.msra.mxu0 %v309
    %443 = vmatprep.subr.bf16.mxu0 0
    %444 = vmatpush1.bf16.msra.mxu0 %v310
    %445 = vmatprep.subr.bf16.mxu0 0
    %446 = vmatpush1.bf16.msra.mxu0 %v311
    %447 = vmatprep.subr.bf16.mxu0 0
    %448 = vmatpush1.bf16.msra.mxu0 %v312
    %449 = vmatprep.subr.bf16.mxu0 0
    %450 = vmatpush1.bf16.msra.mxu0 0
    %451 = vmatprep.subr.bf16.mxu0 0
    %452 = vmatpush1.bf16.msra.mxu0 0
    %453 = vmatprep.subr.bf16.mxu0 0
    %454 = vmatpush1.bf16.msra.mxu0 0
    %455 = vmatprep.subr.bf16.mxu0 0
    %456 = vmatpush1.bf16.msra.mxu0 0
    %457 = vmatprep.subr.bf16.mxu0 0
    %458 = vmatpush1.bf16.msra.mxu0 0
    %459 = vmatprep.subr.bf16.mxu0 0
    %460 = vmatpush1.bf16.msra.mxu0 0
    %461 = vmatprep.subr.bf16.mxu0 0
    %462 = vmatpush1.bf16.msra.mxu0 0
    %463 = vmatprep.subr.bf16.mxu0 0
    %464 = vmatpush1.bf16.msra.mxu0 0
    %465 = vmatprep.mubr.bf16.mxu0 0
    %466 = vmatmul.mubr.bf16.gmra.mrb[0].mxu0 %v25
    %v467 = vpop.f32.mrb[0].mxu0
    %v468 = vadd.f32 %v428, %v467
    %v469 = vpop.f32.mrb[0].mxu0
    %v470 = vpop.f32.mrb[0].mxu0
    %v471 = vpop.f32.mrb[0].mxu0
    %472 = vdwg.mxu0
    %vm473 = vcmask 80896
    %v474 = vsel %vm473, %v468, -inf
    %475 = vmax.xlane.f32.xlu0 %v474
    %v476 = vpop.xlane.xlu0 %475
    %v477 = vsub.f32 %v468, %v476
    %v478 = vmul.f32 %v477, 1.442695
    %v479 = vpow.pop %v478
    %v480 = vsel %vm473, %v479, 0.0
    %481 = vadd.xlane.f32.xlu0 %v480
    %v482 = vpop.xlane.xlu0 %481
    %v483 = vrcp.pop %v482
    %v484 = vmul.f32 %v479, %v483
    %485 = vst.msk [vmem:[#allocation2] sm:$0xff] %vm473, %v484
    // Predicated region
    $region14: #{tpu_custom_call.1} parent=1 // pred_check
      _
    $region15: #{tpu_custom_call.1} parent=1 // pred_check_branch
      %487 = sbr.rel (0) target = $region17
    $region16: #{tpu_custom_call.1} parent=1 // pred_region
      %s489 = ssub.s32 128, 128
      %490 = vsyncadd [#allocation3], %s489
      %s492 = sshll.u32 [#allocation2], 4
      %s493 = int_to_ptr.vmem [resolvable:$true] %s492
      %495 = dma.vmem_to_hbm [thread:$0]  %s493, 128, %s3, [#allocation3]
    $region17: #{tpu_custom_call.1} parent=1 // pred_fallthru
      _
    // Predicated region
    $region18: #{tpu_custom_call.1} parent=1 // pred_check
      _
    $region19: #{tpu_custom_call.1} parent=1 // pred_check_branch
      %497 = sbr.rel (0) target = $region21
    $region20: #{tpu_custom_call.1} parent=1 // pred_region
      %498 = dma.done [#allocation3], 128
    $region21: #{tpu_custom_call.1} parent=1 // pred_fallthru
      _
    %499 = vsyncpa [#allocation3], 1

</llo_original>
